<compile_context>
chip_gen: v7x
topology: tpu7x:2x2x1
jax: 0.10.0
libtpu: 0.0.40
codegen_flags: <defaults>
</compile_context>

<pallas_src>
import functools

import jax
import jax.numpy as jnp
from jax.experimental import pallas as pl
from jax.experimental.pallas import tpu as pltpu

HIDDEN = 64    # logical hidden width (matches the PyTorch DQN)
H_PAD = 128    # lane-dense padded hidden width
A_PAD = 128    # lane-dense padded action width


def _round_up(x, m):
    return (x + m - 1) // m * m


def dqn_kernel(x_ref, w1_ref, wh_ref, w6_ref, b_ref, out_ref):
    """Fused forward: 6 matmuls + ReLU + 2 residual adds, all in VMEM.

    Weights (w1_ref, wh_ref, w6_ref, b_ref) use constant index_maps, so they
    are resident across the batch grid; only x / out tiles are streamed.
    """
    f32 = jnp.float32
    x = x_ref[...]
    b = b_ref[...]                      # (6, 128), loaded once per grid step

    def lin(h, w, i):
        # bias row i, static slice -> (1, 128) broadcast over the batch tile
        return jnp.dot(h, w, preferred_element_type=f32) + b[i:i + 1, :]

    h1 = jnp.maximum(lin(x,  w1_ref[...], 0), 0.0)
    h2 = jnp.maximum(lin(h1, wh_ref[0],   1), 0.0)
    h3 = jnp.maximum(lin(h2, wh_ref[1],   2), 0.0) + h1
    h4 = jnp.maximum(lin(h3, wh_ref[2],   3), 0.0)
    h5 = jnp.maximum(lin(h4, wh_ref[3],   4), 0.0) + h3
    out = lin(h5, w6_ref[...], 5)

    out_ref[...] = out.astype(out_ref.dtype)


def _prepare_params(params):
    """Zero-pad to lane-dense widths and stack 13 tensors into 4 slabs."""
    (w1, b1), (w2, b2), (w3, b3), (w4, b4), (w5, b5), (w6, b6) = params
    s = w1.shape[0]

    def pad_w(w, rows, cols):
        return jnp.pad(w, ((0, rows - w.shape[0]), (0, cols - w.shape[1])))

    def pad_b(bias, cols):
        bias = bias.reshape(1, -1)
        return jnp.pad(bias, ((0, 0), (0, cols - bias.shape[1])))

    w1p = pad_w(w1, s, H_PAD)                                        # (S, 128)
    wh = jnp.stack([pad_w(w, H_PAD, H_PAD) for w in (w2, w3, w4, w5)])  # (4,128,128)
    w6p = pad_w(w6, H_PAD, A_PAD)                                    # (128, 128)
    bs = jnp.concatenate(
        [pad_b(b1, H_PAD), pad_b(b2, H_PAD), pad_b(b3, H_PAD),
         pad_b(b4, H_PAD), pad_b(b5, H_PAD), pad_b(b6, A_PAD)], axis=0)  # (6, 128)
    return w1p, wh, w6p, bs


@functools.partial(jax.jit, static_argnames=("block_b",))
def dqn_forward(x, params, *, block_b=256):
    """x: (B, state_size) f32; params: list of 6 (W, b), W:(in,out), b:(1,out)."""
    B, S = x.shape
    A = params[-1][0].shape[1]

    w1p, wh, w6p, bs = _prepare_params(params)

    # Batch tiling: single block for small B, otherwise block_b rows / step.
    tb = min(block_b, _round_up(B, 8))
    b_pad = _round_up(B, tb)
    if b_pad != B:
        x = jnp.pad(x, ((0, b_pad - B), (0, 0)))
    grid = (b_pad // tb,)

    flops = 2 * b_pad * (S * H_PAD + 4 * H_PAD * H_PAD + H_PAD * A_PAD)
    bytes_accessed = 4 * (b_pad * S + w1p.size + wh.size + w6p.size + bs.size
                          + b_pad * A_PAD)

    out = pl.pallas_call(
        dqn_kernel,
        out_shape=jax.ShapeDtypeStruct((b_pad, A_PAD), jnp.float32),
        grid_spec=pltpu.PrefetchScalarGridSpec(
            num_scalar_prefetch=0,
            grid=grid,
            in_specs=[
                pl.BlockSpec((tb, S), lambda i: (i, 0)),              # streamed x
                pl.BlockSpec((S, H_PAD), lambda i: (0, 0)),           # resident W1
                pl.BlockSpec((4, H_PAD, H_PAD), lambda i: (0, 0, 0)),  # resident W2..W5
                pl.BlockSpec((H_PAD, A_PAD), lambda i: (0, 0)),       # resident W6
                pl.BlockSpec((6, H_PAD), lambda i: (0, 0)),           # resident biases
            ],
            out_specs=pl.BlockSpec((tb, A_PAD), lambda i: (i, 0)),
        ),
        compiler_params=pltpu.CompilerParams(
            dimension_semantics=("parallel",)),
        cost_estimate=pl.CostEstimate(
            flops=flops, transcendentals=0, bytes_accessed=bytes_accessed),
    )(x, w1p, wh, w6p, bs)

    return out[:B, :A]


def init_params(key, state_size, num_actions, hidden=HIDDEN):
    """Deterministic init mirroring PyTorch nn.Linear shapes.

    PyTorch nn.Linear(in, out) stores weight (out, in); we keep the transpose
    (in, out) so the kernel computes x @ W directly (== F.linear(x, W.T, b)).
    """
    dims = [(state_size, hidden), (hidden, hidden), (hidden, hidden),
            (hidden, hidden), (hidden, hidden), (hidden, num_actions)]
    params = []
    for fan_in, fan_out in dims:
        key, kw, kb = jax.random.split(key, 3)
        bound = 1.0 / jnp.sqrt(fan_in)
        w = jax.random.uniform(kw, (fan_in, fan_out), jnp.float32, -bound, bound)
        b = jax.random.uniform(kb, (1, fan_out), jnp.float32, -bound, bound)
        params.append((w, b))
    return params


def dqn_reference(x, params):
    """Pure-JAX reference for correctness checking."""
    def lin(h, p):
        return h @ p[0] + p[1]
    h1 = jax.nn.relu(lin(x, params[0]))
    h2 = jax.nn.relu(lin(h1, params[1]))
    h3 = jax.nn.relu(lin(h2, params[2])) + h1
    h4 = jax.nn.relu(lin(h3, params[3]))
    h5 = jax.nn.relu(lin(h4, params[4])) + h3
    return lin(h5, params[5])


if __name__ == "__main__":
    key = jax.random.PRNGKey(0)
    k_x, k_p = jax.random.split(key)

    batch = 8
    state_size = 16
    num_actions = 4

    x = jax.random.normal(k_x, (batch, state_size), jnp.float32)
    params = init_params(k_p, state_size, num_actions)

    out = dqn_forward(x, params)
    jax.block_until_ready(out)

    ref = dqn_reference(x, params)
    assert out.shape == (batch, num_actions)
    assert jnp.allclose(out, ref, atol=1e-4, rtol=1e-4)

    # Also exercise the gridded / multi-block path (B > tile) once.
    big_x = jax.random.normal(k_x, (512, state_size), jnp.float32)
    big_out = dqn_forward(big_x, params)
    jax.block_until_ready(big_out)
    assert jnp.allclose(big_out, dqn_reference(big_x, params), atol=1e-4, rtol=1e-4)

    print("KERNEL_OK")
</pallas_src>

<mosaic_0001>
module attributes {stable_mosaic.version = 11 : i64} {
  func.func @dqn_kernel(%arg0: i32, %arg1: memref<8x16xf32, #tpu.memory_space<vmem>>, %arg2: memref<16x128xf32, #tpu.memory_space<vmem>>, %arg3: memref<4x128x128xf32, #tpu.memory_space<vmem>>, %arg4: memref<128x128xf32, #tpu.memory_space<vmem>>, %arg5: memref<6x128xf32, #tpu.memory_space<vmem>>, %arg6: memref<8x128xf32, #tpu.memory_space<vmem>>) attributes {dimension_semantics = [#tpu.dimension_semantics<parallel>], iteration_bounds = array<i64: 1>, scalar_prefetch = 0 : i64, scratch_operands = 0 : i64, tpu.core_type = #tpu.core_type<tc>, window_params = [{transform_indices = @transform_0, window_bounds = array<i64: 8, 16>}, {pipeline_mode = #tpu.pipeline_mode<synchronous>, transform_indices = @transform_1, window_bounds = array<i64: 16, 128>}, {pipeline_mode = #tpu.pipeline_mode<synchronous>, transform_indices = @transform_2, window_bounds = array<i64: 4, 128, 128>}, {pipeline_mode = #tpu.pipeline_mode<synchronous>, transform_indices = @transform_3, window_bounds = array<i64: 128, 128>}, {pipeline_mode = #tpu.pipeline_mode<synchronous>, transform_indices = @transform_4, window_bounds = array<i64: 6, 128>}, {transform_indices = @transform_5, window_bounds = array<i64: 8, 128>}]} {
    %c0 = arith.constant 0 : index
    %c0_0 = arith.constant 0 : index
    %0 = vector.load %arg1[%c0, %c0_0] : memref<8x16xf32, #tpu.memory_space<vmem>>, vector<8x16xf32>
    %c0_1 = arith.constant 0 : index
    %c0_2 = arith.constant 0 : index
    %1 = vector.load %arg5[%c0_1, %c0_2] : memref<6x128xf32, #tpu.memory_space<vmem>>, vector<6x128xf32>
    %c0_3 = arith.constant 0 : index
    %c0_4 = arith.constant 0 : index
    %2 = vector.load %arg2[%c0_3, %c0_4] : memref<16x128xf32, #tpu.memory_space<vmem>>, vector<16x128xf32>
    %cst = arith.constant dense<0.000000e+00> : vector<8x128xf32>
    %3 = tpu.matmul %0, %2, %cst {dimension_numbers = #tpu.dot_dimension_numbers<[1], [0], [0], [1], [0, 0, 1, 1], [], []>} : vector<8x16xf32>, vector<16x128xf32>, vector<8x128xf32> -> vector<8x128xf32>
    %4 = vector.extract_strided_slice %1 {offsets = [0, 0], sizes = [1, 128], strides = [1, 1]} : vector<6x128xf32> to vector<1x128xf32>
    %5 = vector.broadcast %4 : vector<1x128xf32> to vector<8x128xf32>
    %6 = arith.addf %3, %5 : vector<8x128xf32>
    %cst_5 = arith.constant 0.000000e+00 : f32
    %7 = vector.broadcast %cst_5 : f32 to vector<8x128xf32>
    %8 = arith.maximumf %6, %7 : vector<8x128xf32>
    %c0_6 = arith.constant 0 : index
    %c0_7 = arith.constant 0 : index
    %c0_8 = arith.constant 0 : index
    %9 = vector.load %arg3[%c0_6, %c0_7, %c0_8] : memref<4x128x128xf32, #tpu.memory_space<vmem>>, vector<1x128x128xf32>
    %10 = vector.shape_cast %9 : vector<1x128x128xf32> to vector<128x128xf32>
    %cst_9 = arith.constant dense<0.000000e+00> : vector<8x128xf32>
    %11 = tpu.matmul %8, %10, %cst_9 {dimension_numbers = #tpu.dot_dimension_numbers<[1], [0], [0], [1], [0, 0, 1, 1], [], []>} : vector<8x128xf32>, vector<128x128xf32>, vector<8x128xf32> -> vector<8x128xf32>
    %12 = vector.extract_strided_slice %1 {offsets = [1, 0], sizes = [1, 128], strides = [1, 1]} : vector<6x128xf32> to vector<1x128xf32>
    %13 = vector.broadcast %12 : vector<1x128xf32> to vector<8x128xf32>
    %14 = arith.addf %11, %13 : vector<8x128xf32>
    %cst_10 = arith.constant 0.000000e+00 : f32
    %15 = vector.broadcast %cst_10 : f32 to vector<8x128xf32>
    %16 = arith.maximumf %14, %15 : vector<8x128xf32>
    %c1 = arith.constant 1 : index
    %c0_11 = arith.constant 0 : index
    %c0_12 = arith.constant 0 : index
    %17 = vector.load %arg3[%c1, %c0_11, %c0_12] : memref<4x128x128xf32, #tpu.memory_space<vmem>>, vector<1x128x128xf32>
    %18 = vector.shape_cast %17 : vector<1x128x128xf32> to vector<128x128xf32>
    %cst_13 = arith.constant dense<0.000000e+00> : vector<8x128xf32>
    %19 = tpu.matmul %16, %18, %cst_13 {dimension_numbers = #tpu.dot_dimension_numbers<[1], [0], [0], [1], [0, 0, 1, 1], [], []>} : vector<8x128xf32>, vector<128x128xf32>, vector<8x128xf32> -> vector<8x128xf32>
    %20 = vector.extract_strided_slice %1 {offsets = [2, 0], sizes = [1, 128], strides = [1, 1]} : vector<6x128xf32> to vector<1x128xf32>
    %21 = vector.broadcast %20 : vector<1x128xf32> to vector<8x128xf32>
    %22 = arith.addf %19, %21 : vector<8x128xf32>
    %cst_14 = arith.constant 0.000000e+00 : f32
    %23 = vector.broadcast %cst_14 : f32 to vector<8x128xf32>
    %24 = arith.maximumf %22, %23 : vector<8x128xf32>
    %25 = arith.addf %24, %8 : vector<8x128xf32>
    %c2 = arith.constant 2 : index
    %c0_15 = arith.constant 0 : index
    %c0_16 = arith.constant 0 : index
    %26 = vector.load %arg3[%c2, %c0_15, %c0_16] : memref<4x128x128xf32, #tpu.memory_space<vmem>>, vector<1x128x128xf32>
    %27 = vector.shape_cast %26 : vector<1x128x128xf32> to vector<128x128xf32>
    %cst_17 = arith.constant dense<0.000000e+00> : vector<8x128xf32>
    %28 = tpu.matmul %25, %27, %cst_17 {dimension_numbers = #tpu.dot_dimension_numbers<[1], [0], [0], [1], [0, 0, 1, 1], [], []>} : vector<8x128xf32>, vector<128x128xf32>, vector<8x128xf32> -> vector<8x128xf32>
    %29 = vector.extract_strided_slice %1 {offsets = [3, 0], sizes = [1, 128], strides = [1, 1]} : vector<6x128xf32> to vector<1x128xf32>
    %30 = vector.broadcast %29 : vector<1x128xf32> to vector<8x128xf32>
    %31 = arith.addf %28, %30 : vector<8x128xf32>
    %cst_18 = arith.constant 0.000000e+00 : f32
    %32 = vector.broadcast %cst_18 : f32 to vector<8x128xf32>
    %33 = arith.maximumf %31, %32 : vector<8x128xf32>
    %c3 = arith.constant 3 : index
    %c0_19 = arith.constant 0 : index
    %c0_20 = arith.constant 0 : index
    %34 = vector.load %arg3[%c3, %c0_19, %c0_20] : memref<4x128x128xf32, #tpu.memory_space<vmem>>, vector<1x128x128xf32>
    %35 = vector.shape_cast %34 : vector<1x128x128xf32> to vector<128x128xf32>
    %cst_21 = arith.constant dense<0.000000e+00> : vector<8x128xf32>
    %36 = tpu.matmul %33, %35, %cst_21 {dimension_numbers = #tpu.dot_dimension_numbers<[1], [0], [0], [1], [0, 0, 1, 1], [], []>} : vector<8x128xf32>, vector<128x128xf32>, vector<8x128xf32> -> vector<8x128xf32>
    %37 = vector.extract_strided_slice %1 {offsets = [4, 0], sizes = [1, 128], strides = [1, 1]} : vector<6x128xf32> to vector<1x128xf32>
    %38 = vector.broadcast %37 : vector<1x128xf32> to vector<8x128xf32>
    %39 = arith.addf %36, %38 : vector<8x128xf32>
    %cst_22 = arith.constant 0.000000e+00 : f32
    %40 = vector.broadcast %cst_22 : f32 to vector<8x128xf32>
    %41 = arith.maximumf %39, %40 : vector<8x128xf32>
    %42 = arith.addf %41, %25 : vector<8x128xf32>
    %c0_23 = arith.constant 0 : index
    %c0_24 = arith.constant 0 : index
    %43 = vector.load %arg4[%c0_23, %c0_24] : memref<128x128xf32, #tpu.memory_space<vmem>>, vector<128x128xf32>
    %cst_25 = arith.constant dense<0.000000e+00> : vector<8x128xf32>
    %44 = tpu.matmul %42, %43, %cst_25 {dimension_numbers = #tpu.dot_dimension_numbers<[1], [0], [0], [1], [0, 0, 1, 1], [], []>} : vector<8x128xf32>, vector<128x128xf32>, vector<8x128xf32> -> vector<8x128xf32>
    %45 = vector.extract_strided_slice %1 {offsets = [5, 0], sizes = [1, 128], strides = [1, 1]} : vector<6x128xf32> to vector<1x128xf32>
    %46 = vector.broadcast %45 : vector<1x128xf32> to vector<8x128xf32>
    %47 = arith.addf %44, %46 : vector<8x128xf32>
    %c0_26 = arith.constant 0 : index
    %c0_27 = arith.constant 0 : index
    %48 = vector.load %arg6[%c0_26, %c0_27] : memref<8x128xf32, #tpu.memory_space<vmem>>, vector<8x128xf32>
    tpu.vector_store %arg6[%c0_26, %c0_27], %47 {strides = array<i32>} : memref<8x128xf32, #tpu.memory_space<vmem>>, vector<8x128xf32>,
    return
  }
  func.func @transform_0(%arg0: i32) -> (i32, i32) {
    %c0_i32 = arith.constant 0 : i32
    %c0_i32_0 = arith.constant 0 : i32
    return %arg0, %c0_i32 : i32, i32
  }
  func.func @transform_1(%arg0: i32) -> (i32, i32) {
    %c0_i32 = arith.constant 0 : i32
    %c0_i32_0 = arith.constant 0 : i32
    %c0_i32_1 = arith.constant 0 : i32
    return %c0_i32, %c0_i32_0 : i32, i32
  }
  func.func @transform_2(%arg0: i32) -> (i32, i32, i32) {
    %c0_i32 = arith.constant 0 : i32
    %c0_i32_0 = arith.constant 0 : i32
    %c0_i32_1 = arith.constant 0 : i32
    %c0_i32_2 = arith.constant 0 : i32
    return %c0_i32, %c0_i32_0, %c0_i32_1 : i32, i32, i32
  }
  func.func @transform_3(%arg0: i32) -> (i32, i32) {
    %c0_i32 = arith.constant 0 : i32
    %c0_i32_0 = arith.constant 0 : i32
    %c0_i32_1 = arith.constant 0 : i32
    return %c0_i32, %c0_i32_0 : i32, i32
  }
  func.func @transform_4(%arg0: i32) -> (i32, i32) {
    %c0_i32 = arith.constant 0 : i32
    %c0_i32_0 = arith.constant 0 : i32
    %c0_i32_1 = arith.constant 0 : i32
    return %c0_i32, %c0_i32_0 : i32, i32
  }
  func.func @transform_5(%arg0: i32) -> (i32, i32) {
    %c0_i32 = arith.constant 0 : i32
    %c0_i32_0 = arith.constant 0 : i32
    return %arg0, %c0_i32 : i32, i32
  }
}

</mosaic_0001>

<llo_original>
// kernel: dqn_forward.1
$region0: #{dqn_forward.1}
  #allocation0 [shape = 'u32[]', space=smem, size = 0x4, offset = 0x4, fixed_abs, tag = 'smem constant byte address 0x4 - core index']
  #allocation1 [shape = 'u32[144,128]{1,0:T(1,128)}', space=vmem, size = 0x12000, scoped, tag = 'internal scratch']
  %s0 = inlined_call_operand.vmem [shape: f32[8,16], index: 0, kind: input, shape index: {}]
  %s1 = inlined_call_operand.vmem [shape: f32[16,128], index: 1, kind: input, shape index: {}]
  %s2 = inlined_call_operand.vmem [shape: f32[4,128,128], index: 2, kind: input, shape index: {}]
  %s3 = inlined_call_operand.vmem [shape: f32[128,128], index: 3, kind: input, shape index: {}]
  %s4 = inlined_call_operand.vmem [shape: f32[6,128], index: 4, kind: input, shape index: {}]
  %s5 = inlined_call_operand.vmem [shape: f32[8,128], index: 5, kind: output, shape index: {}]
  %s6 = sld [smem:[#allocation0]]
  $region30: #{dqn_forward.1} parent=0
    _
  %s8 = ssub.s32 1, %s6
  %s9 = scalar_select 0, %s8, %s6
  // Predicated region
  $region2: #{dqn_forward.1} parent=0 // pred_check
    _
  $region3: #{dqn_forward.1} parent=0 // pred_check_branch
    %11 = sbr.rel (0) target = $region5
  $region4: #{dqn_forward.1} parent=0 // pred_region
    _
  $region5: #{dqn_forward.1} parent=0 // pred_fallthru
    _
  // Predicated region
  $region6: #{dqn_forward.1} parent=0 // pred_check
    _
  $region7: #{dqn_forward.1} parent=0 // pred_check_branch
    %13 = sbr.rel (0) target = $region9
  $region8: #{dqn_forward.1} parent=0 // pred_region
    _
  $region9: #{dqn_forward.1} parent=0 // pred_fallthru
    _
  // Predicated region
  $region10: #{dqn_forward.1} parent=0 // pred_check
    _
  $region11: #{dqn_forward.1} parent=0 // pred_check_branch
    %15 = sbr.rel (0) target = $region13
  $region12: #{dqn_forward.1} parent=0 // pred_region
    _
  $region13: #{dqn_forward.1} parent=0 // pred_fallthru
    _
  // Predicated region
  $region14: #{dqn_forward.1} parent=0 // pred_check
    _
  $region15: #{dqn_forward.1} parent=0 // pred_check_branch
    %17 = sbr.rel (0) target = $region17
  $region16: #{dqn_forward.1} parent=0 // pred_region
    _
  $region17: #{dqn_forward.1} parent=0 // pred_fallthru
    _
  // Predicated region
  $region18: #{dqn_forward.1} parent=0 // pred_check
    _
  $region19: #{dqn_forward.1} parent=0 // pred_check_branch
    %19 = sbr.rel (0) target = $region21
  $region20: #{dqn_forward.1} parent=0 // pred_region
    _
  $region21: #{dqn_forward.1} parent=0 // pred_fallthru
    _
  %v20 = vld [vmem:[%s0] sm:$0xff]
  %v21 = vld [vmem:[%s4] sm:$0x3f]
  %v22 = vld [vmem:[%s1] sm:$0xff]
  %v23 = vld [vmem:[%s1 + $0x8] sm:$0xff]
  %v24 = vlaneseq
  %v25 = vshrl.u32 %v24, 7
  %v26 = vsub.s32 0, %v25
  %v27 = vrot.slane %v21, %v26
  %vm28 = vcmask 130048
  %v30 = vsel %vm28, %v20, 0
  %32 = vmatprep.subr.mxu0 0.0
  %33 = vmatpush1.msra.mxu0 %v22
  %34 = vmatprep.subr.mxu0 0.0
  %35 = vmatpush1.msra.mxu0 %v23
  %36 = vmatprep.subr.mxu0 0.0
  %37 = vmatpush1.msra.mxu0 0.0
  %38 = vmatprep.subr.mxu0 0.0
  %39 = vmatpush1.msra.mxu0 0.0
  %40 = vmatprep.subr.mxu0 0.0
  %41 = vmatpush1.msra.mxu0 0.0
  %42 = vmatprep.subr.mxu0 0.0
  %43 = vmatpush1.msra.mxu0 0.0
  %44 = vmatprep.subr.mxu0 0.0
  %45 = vmatpush1.msra.mxu0 0.0
  %46 = vmatprep.subr.mxu0 0.0
  %47 = vmatpush1.msra.mxu0 0.0
  %48 = vmatprep.subr.mxu0 0.0
  %49 = vmatpush1.msra.mxu0 0.0
  %50 = vmatprep.subr.mxu0 0.0
  %51 = vmatpush1.msra.mxu0 0.0
  %52 = vmatprep.subr.mxu0 0.0
  %53 = vmatpush1.msra.mxu0 0.0
  %54 = vmatprep.subr.mxu0 0.0
  %55 = vmatpush1.msra.mxu0 0.0
  %56 = vmatprep.subr.mxu0 0.0
  %57 = vmatpush1.msra.mxu0 0.0
  %58 = vmatprep.subr.mxu0 0.0
  %59 = vmatpush1.msra.mxu0 0.0
  %60 = vmatprep.subr.mxu0 0.0
  %61 = vmatpush1.msra.mxu0 0.0
  %62 = vmatprep.subr.mxu0 0.0
  %63 = vmatpush1.msra.mxu0 0.0
  %64 = vmatprep.subr.mxu0 0.0
  %65 = vmatpush1.msra.mxu0 0.0
  %66 = vmatprep.subr.mxu0 0.0
  %67 = vmatpush1.msra.mxu0 0.0
  %68 = vmatprep.subr.mxu0 0.0
  %69 = vmatpush1.msra.mxu0 0.0
  %70 = vmatprep.subr.mxu0 0.0
  %71 = vmatpush1.msra.mxu0 0.0
  %72 = vmatprep.subr.mxu0 0.0
  %73 = vmatpush1.msra.mxu0 0.0
  %74 = vmatprep.subr.mxu0 0.0
  %75 = vmatpush1.msra.mxu0 0.0
  %76 = vmatprep.subr.mxu0 0.0
  %77 = vmatpush1.msra.mxu0 0.0
  %78 = vmatprep.subr.mxu0 0.0
  %79 = vmatpush1.msra.mxu0 0.0
  %80 = vmatprep.subr.mxu0 0.0
  %81 = vmatpush1.msra.mxu0 0.0
  %82 = vmatprep.subr.mxu0 0.0
  %83 = vmatpush1.msra.mxu0 0.0
  %84 = vmatprep.subr.mxu0 0.0
  %85 = vmatpush1.msra.mxu0 0.0
  %86 = vmatprep.subr.mxu0 0.0
  %87 = vmatpush1.msra.mxu0 0.0
  %88 = vmatprep.subr.mxu0 0.0
  %89 = vmatpush1.msra.mxu0 0.0
  %90 = vmatprep.subr.mxu0 0.0
  %91 = vmatpush1.msra.mxu0 0.0
  %92 = vmatprep.subr.mxu0 0.0
  %93 = vmatpush1.msra.mxu0 0.0
  %94 = vmatprep.subr.mxu0 0.0
  %95 = vmatpush1.msra.mxu0 0.0
  %96 = vmatprep.mubr.f32.mxu0 0.0
  %97 = vmatmul.mubr.f32.gmra.mrb[0].mxu0 %v30
  %v98 = vpop.f32.mrb[0].mxu0
  %v99 = vadd.f32 %v27, %v98
  %v100 = vpop.f32.mrb[0].mxu0
  %101 = vdwg.mxu0
  %v102 = vmax.f32 %v99, 0.0
  %v103 = vld [vmem:[%s2] sm:$0xff]
  %v104 = vld [vmem:[%s2 + $0x8] sm:$0xff]
  %v105 = vld [vmem:[%s2 + $0x10] sm:$0xff]
  %v106 = vld [vmem:[%s2 + $0x18] sm:$0xff]
  %v107 = vld [vmem:[%s2 + $0x20] sm:$0xff]
  %v108 = vld [vmem:[%s2 + $0x28] sm:$0xff]
  %v109 = vld [vmem:[%s2 + $0x30] sm:$0xff]
  %v110 = vld [vmem:[%s2 + $0x38] sm:$0xff]
  %v111 = vld [vmem:[%s2 + $0x40] sm:$0xff]
  %v112 = vld [vmem:[%s2 + $0x48] sm:$0xff]
  %v113 = vld [vmem:[%s2 + $0x50] sm:$0xff]
  %v114 = vld [vmem:[%s2 + $0x58] sm:$0xff]
  %v115 = vld [vmem:[%s2 + $0x60] sm:$0xff]
  %v116 = vld [vmem:[%s2 + $0x68] sm:$0xff]
  %v117 = vld [vmem:[%s2 + $0x70] sm:$0xff]
  %v118 = vld [vmem:[%s2 + $0x78] sm:$0xff]
  %v119 = vlaneseq
  %v120 = vshrl.u32 %v119, 7
  %v121 = vsub.s32 1, %v120
  %v122 = vrot.slane %v21, %v121
  %123 = vmatprep.subr.mxu0 0.0
  %124 = vmatpush1.msra.mxu0 %v103
  %125 = vmatprep.subr.mxu0 0.0
  %126 = vmatpush1.msra.mxu0 %v104
  %127 = vmatprep.subr.mxu0 0.0
  %128 = vmatpush1.msra.mxu0 %v105
  %129 = vmatprep.subr.mxu0 0.0
  %130 = vmatpush1.msra.mxu0 %v106
  %131 = vmatprep.subr.mxu0 0.0
  %132 = vmatpush1.msra.mxu0 %v107
  %133 = vmatprep.subr.mxu0 0.0
  %134 = vmatpush1.msra.mxu0 %v108
  %135 = vmatprep.subr.mxu0 0.0
  %136 = vmatpush1.msra.mxu0 %v109
  %137 = vmatprep.subr.mxu0 0.0
  %138 = vmatpush1.msra.mxu0 %v110
  %139 = vmatprep.subr.mxu0 0.0
  %140 = vmatpush1.msra.mxu0 %v111
  %141 = vmatprep.subr.mxu0 0.0
  %142 = vmatpush1.msra.mxu0 %v112
  %143 = vmatprep.subr.mxu0 0.0
  %144 = vmatpush1.msra.mxu0 %v113
  %145 = vmatprep.subr.mxu0 0.0
  %146 = vmatpush1.msra.mxu0 %v114
  %147 = vmatprep.subr.mxu0 0.0
  %148 = vmatpush1.msra.mxu0 %v115
  %149 = vmatprep.subr.mxu0 0.0
  %150 = vmatpush1.msra.mxu0 %v116
  %151 = vmatprep.subr.mxu0 0.0
  %152 = vmatpush1.msra.mxu0 %v117
  %153 = vmatprep.subr.mxu0 0.0
  %154 = vmatpush1.msra.mxu0 %v118
  %155 = vmatprep.subr.mxu0 0.0
  %156 = vmatpush1.msra.mxu0 0.0
  %157 = vmatprep.subr.mxu0 0.0
  %158 = vmatpush1.msra.mxu0 0.0
  %159 = vmatprep.subr.mxu0 0.0
  %160 = vmatpush1.msra.mxu0 0.0
  %161 = vmatprep.subr.mxu0 0.0
  %162 = vmatpush1.msra.mxu0 0.0
  %163 = vmatprep.subr.mxu0 0.0
  %164 = vmatpush1.msra.mxu0 0.0
  %165 = vmatprep.subr.mxu0 0.0
  %166 = vmatpush1.msra.mxu0 0.0
  %167 = vmatprep.subr.mxu0 0.0
  %168 = vmatpush1.msra.mxu0 0.0
  %169 = vmatprep.subr.mxu0 0.0
  %170 = vmatpush1.msra.mxu0 0.0
  %171 = vmatprep.subr.mxu0 0.0
  %172 = vmatpush1.msra.mxu0 0.0
  %173 = vmatprep.subr.mxu0 0.0
  %174 = vmatpush1.msra.mxu0 0.0
  %175 = vmatprep.subr.mxu0 0.0
  %176 = vmatpush1.msra.mxu0 0.0
  %177 = vmatprep.subr.mxu0 0.0
  %178 = vmatpush1.msra.mxu0 0.0
  %179 = vmatprep.subr.mxu0 0.0
  %180 = vmatpush1.msra.mxu0 0.0
  %181 = vmatprep.subr.mxu0 0.0
  %182 = vmatpush1.msra.mxu0 0.0
  %183 = vmatprep.subr.mxu0 0.0
  %184 = vmatpush1.msra.mxu0 0.0
  %185 = vmatprep.subr.mxu0 0.0
  %186 = vmatpush1.msra.mxu0 0.0
  %187 = vmatprep.mubr.f32.mxu0 0.0
  %188 = vmatmul.mubr.f32.gmra.mrb[0].mxu0 %v102
  %v189 = vpop.f32.mrb[0].mxu0
  %v190 = vadd.f32 %v122, %v189
  %v191 = vpop.f32.mrb[0].mxu0
  %192 = vdwg.mxu0
  %v193 = vmax.f32 %v190, 0.0
  %s194 = scalar_lea.vmem %s2, 128
  %v195 = vld [vmem:[%s194] sm:$0xff]
  %v196 = vld [vmem:[%s194 + $0x8] sm:$0xff]
  %v197 = vld [vmem:[%s194 + $0x10] sm:$0xff]
  %v198 = vld [vmem:[%s194 + $0x18] sm:$0xff]
  %v199 = vld [vmem:[%s194 + $0x20] sm:$0xff]
  %v200 = vld [vmem:[%s194 + $0x28] sm:$0xff]
  %v201 = vld [vmem:[%s194 + $0x30] sm:$0xff]
  %v202 = vld [vmem:[%s194 + $0x38] sm:$0xff]
  %v203 = vld [vmem:[%s194 + $0x40] sm:$0xff]
  %v204 = vld [vmem:[%s194 + $0x48] sm:$0xff]
  %v205 = vld [vmem:[%s194 + $0x50] sm:$0xff]
  %v206 = vld [vmem:[%s194 + $0x58] sm:$0xff]
  %v207 = vld [vmem:[%s194 + $0x60] sm:$0xff]
  %v208 = vld [vmem:[%s194 + $0x68] sm:$0xff]
  %v209 = vld [vmem:[%s194 + $0x70] sm:$0xff]
  %v210 = vld [vmem:[%s194 + $0x78] sm:$0xff]
  %v211 = vlaneseq
  %v212 = vshrl.u32 %v211, 7
  %v213 = vsub.s32 2, %v212
  %v214 = vrot.slane %v21, %v213
  %215 = vmatprep.subr.mxu0 0.0
  %216 = vmatpush1.msra.mxu0 %v195
  %217 = vmatprep.subr.mxu0 0.0
  %218 = vmatpush1.msra.mxu0 %v196
  %219 = vmatprep.subr.mxu0 0.0
  %220 = vmatpush1.msra.mxu0 %v197
  %221 = vmatprep.subr.mxu0 0.0
  %222 = vmatpush1.msra.mxu0 %v198
  %223 = vmatprep.subr.mxu0 0.0
  %224 = vmatpush1.msra.mxu0 %v199
  %225 = vmatprep.subr.mxu0 0.0
  %226 = vmatpush1.msra.mxu0 %v200
  %227 = vmatprep.subr.mxu0 0.0
  %228 = vmatpush1.msra.mxu0 %v201
  %229 = vmatprep.subr.mxu0 0.0
  %230 = vmatpush1.msra.mxu0 %v202
  %231 = vmatprep.subr.mxu0 0.0
  %232 = vmatpush1.msra.mxu0 %v203
  %233 = vmatprep.subr.mxu0 0.0
  %234 = vmatpush1.msra.mxu0 %v204
  %235 = vmatprep.subr.mxu0 0.0
  %236 = vmatpush1.msra.mxu0 %v205
  %237 = vmatprep.subr.mxu0 0.0
  %238 = vmatpush1.msra.mxu0 %v206
  %239 = vmatprep.subr.mxu0 0.0
  %240 = vmatpush1.msra.mxu0 %v207
  %241 = vmatprep.subr.mxu0 0.0
  %242 = vmatpush1.msra.mxu0 %v208
  %243 = vmatprep.subr.mxu0 0.0
  %244 = vmatpush1.msra.mxu0 %v209
  %245 = vmatprep.subr.mxu0 0.0
  %246 = vmatpush1.msra.mxu0 %v210
  %247 = vmatprep.subr.mxu0 0.0
  %248 = vmatpush1.msra.mxu0 0.0
  %249 = vmatprep.subr.mxu0 0.0
  %250 = vmatpush1.msra.mxu0 0.0
  %251 = vmatprep.subr.mxu0 0.0
  %252 = vmatpush1.msra.mxu0 0.0
  %253 = vmatprep.subr.mxu0 0.0
  %254 = vmatpush1.msra.mxu0 0.0
  %255 = vmatprep.subr.mxu0 0.0
  %256 = vmatpush1.msra.mxu0 0.0
  %257 = vmatprep.subr.mxu0 0.0
  %258 = vmatpush1.msra.mxu0 0.0
  %259 = vmatprep.subr.mxu0 0.0
  %260 = vmatpush1.msra.mxu0 0.0
  %261 = vmatprep.subr.mxu0 0.0
  %262 = vmatpush1.msra.mxu0 0.0
  %263 = vmatprep.subr.mxu0 0.0
  %264 = vmatpush1.msra.mxu0 0.0
  %265 = vmatprep.subr.mxu0 0.0
  %266 = vmatpush1.msra.mxu0 0.0
  %267 = vmatprep.subr.mxu0 0.0
  %268 = vmatpush1.msra.mxu0 0.0
  %269 = vmatprep.subr.mxu0 0.0
  %270 = vmatpush1.msra.mxu0 0.0
  %271 = vmatprep.subr.mxu0 0.0
  %272 = vmatpush1.msra.mxu0 0.0
  %273 = vmatprep.subr.mxu0 0.0
  %274 = vmatpush1.msra.mxu0 0.0
  %275 = vmatprep.subr.mxu0 0.0
  %276 = vmatpush1.msra.mxu0 0.0
  %277 = vmatprep.subr.mxu0 0.0
  %278 = vmatpush1.msra.mxu0 0.0
  %279 = vmatprep.mubr.f32.mxu0 0.0
  %280 = vmatmul.mubr.f32.gmra.mrb[0].mxu0 %v193
  %v281 = vpop.f32.mrb[0].mxu0
  %v282 = vadd.f32 %v214, %v281
  %v283 = vpop.f32.mrb[0].mxu0
  %284 = vdwg.mxu0
  %v285 = vmax.f32 %v282, 0.0
  %v286 = vadd.f32 %v285, %v102
  %s287 = scalar_lea.vmem %s2, 256
  %v288 = vld [vmem:[%s287] sm:$0xff]
  %v289 = vld [vmem:[%s287 + $0x8] sm:$0xff]
  %v290 = vld [vmem:[%s287 + $0x10] sm:$0xff]
  %v291 = vld [vmem:[%s287 + $0x18] sm:$0xff]
  %v292 = vld [vmem:[%s287 + $0x20] sm:$0xff]
  %v293 = vld [vmem:[%s287 + $0x28] sm:$0xff]
  %v294 = vld [vmem:[%s287 + $0x30] sm:$0xff]
  %v295 = vld [vmem:[%s287 + $0x38] sm:$0xff]
  %v296 = vld [vmem:[%s287 + $0x40] sm:$0xff]
  %v297 = vld [vmem:[%s287 + $0x48] sm:$0xff]
  %v298 = vld [vmem:[%s287 + $0x50] sm:$0xff]
  %v299 = vld [vmem:[%s287 + $0x58] sm:$0xff]
  %v300 = vld [vmem:[%s287 + $0x60] sm:$0xff]
  %v301 = vld [vmem:[%s287 + $0x68] sm:$0xff]
  %v302 = vld [vmem:[%s287 + $0x70] sm:$0xff]
  %v303 = vld [vmem:[%s287 + $0x78] sm:$0xff]
  %v304 = vlaneseq
  %v305 = vshrl.u32 %v304, 7
  %v306 = vsub.s32 3, %v305
  %v307 = vrot.slane %v21, %v306
  %308 = vmatprep.subr.mxu0 0.0
  %309 = vmatpush1.msra.mxu0 %v288
  %310 = vmatprep.subr.mxu0 0.0
  %311 = vmatpush1.msra.mxu0 %v289
  %312 = vmatprep.subr.mxu0 0.0
  %313 = vmatpush1.msra.mxu0 %v290
  %314 = vmatprep.subr.mxu0 0.0
  %315 = vmatpush1.msra.mxu0 %v291
  %316 = vmatprep.subr.mxu0 0.0
  %317 = vmatpush1.msra.mxu0 %v292
  %318 = vmatprep.subr.mxu0 0.0
  %319 = vmatpush1.msra.mxu0 %v293
  %320 = vmatprep.subr.mxu0 0.0
  %321 = vmatpush1.msra.mxu0 %v294
  %322 = vmatprep.subr.mxu0 0.0
  %323 = vmatpush1.msra.mxu0 %v295
  %324 = vmatprep.subr.mxu0 0.0
  %325 = vmatpush1.msra.mxu0 %v296
  %326 = vmatprep.subr.mxu0 0.0
  %327 = vmatpush1.msra.mxu0 %v297
  %328 = vmatprep.subr.mxu0 0.0
  %329 = vmatpush1.msra.mxu0 %v298
  %330 = vmatprep.subr.mxu0 0.0
  %331 = vmatpush1.msra.mxu0 %v299
  %332 = vmatprep.subr.mxu0 0.0
  %333 = vmatpush1.msra.mxu0 %v300
  %334 = vmatprep.subr.mxu0 0.0
  %335 = vmatpush1.msra.mxu0 %v301
  %336 = vmatprep.subr.mxu0 0.0
  %337 = vmatpush1.msra.mxu0 %v302
  %338 = vmatprep.subr.mxu0 0.0
  %339 = vmatpush1.msra.mxu0 %v303
  %340 = vmatprep.subr.mxu0 0.0
  %341 = vmatpush1.msra.mxu0 0.0
  %342 = vmatprep.subr.mxu0 0.0
  %343 = vmatpush1.msra.mxu0 0.0
  %344 = vmatprep.subr.mxu0 0.0
  %345 = vmatpush1.msra.mxu0 0.0
  %346 = vmatprep.subr.mxu0 0.0
  %347 = vmatpush1.msra.mxu0 0.0
  %348 = vmatprep.subr.mxu0 0.0
  %349 = vmatpush1.msra.mxu0 0.0
  %350 = vmatprep.subr.mxu0 0.0
  %351 = vmatpush1.msra.mxu0 0.0
  %352 = vmatprep.subr.mxu0 0.0
  %353 = vmatpush1.msra.mxu0 0.0
  %354 = vmatprep.subr.mxu0 0.0
  %355 = vmatpush1.msra.mxu0 0.0
  %356 = vmatprep.subr.mxu0 0.0
  %357 = vmatpush1.msra.mxu0 0.0
  %358 = vmatprep.subr.mxu0 0.0
  %359 = vmatpush1.msra.mxu0 0.0
  %360 = vmatprep.subr.mxu0 0.0
  %361 = vmatpush1.msra.mxu0 0.0
  %362 = vmatprep.subr.mxu0 0.0
  %363 = vmatpush1.msra.mxu0 0.0
  %364 = vmatprep.subr.mxu0 0.0
  %365 = vmatpush1.msra.mxu0 0.0
  %366 = vmatprep.subr.mxu0 0.0
  %367 = vmatpush1.msra.mxu0 0.0
  %368 = vmatprep.subr.mxu0 0.0
  %369 = vmatpush1.msra.mxu0 0.0
  %370 = vmatprep.subr.mxu0 0.0
  %371 = vmatpush1.msra.mxu0 0.0
  %372 = vmatprep.mubr.f32.mxu0 0.0
  %373 = vmatmul.mubr.f32.gmra.mrb[0].mxu0 %v286
  %v374 = vpop.f32.mrb[0].mxu0
  %v375 = vadd.f32 %v307, %v374
  %v376 = vpop.f32.mrb[0].mxu0
  %377 = vdwg.mxu0
  %v378 = vmax.f32 %v375, 0.0
  %s379 = scalar_lea.vmem %s2, 384
  %v380 = vld [vmem:[%s379] sm:$0xff]
  %v381 = vld [vmem:[%s379 + $0x8] sm:$0xff]
  %v382 = vld [vmem:[%s379 + $0x10] sm:$0xff]
  %v383 = vld [vmem:[%s379 + $0x18] sm:$0xff]
  %v384 = vld [vmem:[%s379 + $0x20] sm:$0xff]
  %v385 = vld [vmem:[%s379 + $0x28] sm:$0xff]
  %v386 = vld [vmem:[%s379 + $0x30] sm:$0xff]
  %v387 = vld [vmem:[%s379 + $0x38] sm:$0xff]
  %v388 = vld [vmem:[%s379 + $0x40] sm:$0xff]
  %v389 = vld [vmem:[%s379 + $0x48] sm:$0xff]
  %v390 = vld [vmem:[%s379 + $0x50] sm:$0xff]
  %v391 = vld [vmem:[%s379 + $0x58] sm:$0xff]
  %v392 = vld [vmem:[%s379 + $0x60] sm:$0xff]
  %v393 = vld [vmem:[%s379 + $0x68] sm:$0xff]
  %v394 = vld [vmem:[%s379 + $0x70] sm:$0xff]
  %v395 = vld [vmem:[%s379 + $0x78] sm:$0xff]
  %v396 = vlaneseq
  %v397 = vshrl.u32 %v396, 7
  %v398 = vsub.s32 4, %v397
  %v399 = vrot.slane %v21, %v398
  %400 = vmatprep.subr.mxu0 0.0
  %401 = vmatpush1.msra.mxu0 %v380
  %402 = vmatprep.subr.mxu0 0.0
  %403 = vmatpush1.msra.mxu0 %v381
  %404 = vmatprep.subr.mxu0 0.0
  %405 = vmatpush1.msra.mxu0 %v382
  %406 = vmatprep.subr.mxu0 0.0
  %407 = vmatpush1.msra.mxu0 %v383
  %408 = vmatprep.subr.mxu0 0.0
  %409 = vmatpush1.msra.mxu0 %v384
  %410 = vmatprep.subr.mxu0 0.0
  %411 = vmatpush1.msra.mxu0 %v385
  %412 = vmatprep.subr.mxu0 0.0
  %413 = vmatpush1.msra.mxu0 %v386
  %414 = vmatprep.subr.mxu0 0.0
  %415 = vmatpush1.msra.mxu0 %v387
  %416 = vmatprep.subr.mxu0 0.0
  %417 = vmatpush1.msra.mxu0 %v388
  %418 = vmatprep.subr.mxu0 0.0
  %419 = vmatpush1.msra.mxu0 %v389
  %420 = vmatprep.subr.mxu0 0.0
  %421 = vmatpush1.msra.mxu0 %v390
  %422 = vmatprep.subr.mxu0 0.0
  %423 = vmatpush1.msra.mxu0 %v391
  %424 = vmatprep.subr.mxu0 0.0
  %425 = vmatpush1.msra.mxu0 %v392
  %426 = vmatprep.subr.mxu0 0.0
  %427 = vmatpush1.msra.mxu0 %v393
  %428 = vmatprep.subr.mxu0 0.0
  %429 = vmatpush1.msra.mxu0 %v394
  %430 = vmatprep.subr.mxu0 0.0
  %431 = vmatpush1.msra.mxu0 %v395
  %432 = vmatprep.subr.mxu0 0.0
  %433 = vmatpush1.msra.mxu0 0.0
  %434 = vmatprep.subr.mxu0 0.0
  %435 = vmatpush1.msra.mxu0 0.0
  %436 = vmatprep.subr.mxu0 0.0
  %437 = vmatpush1.msra.mxu0 0.0
  %438 = vmatprep.subr.mxu0 0.0
  %439 = vmatpush1.msra.mxu0 0.0
  %440 = vmatprep.subr.mxu0 0.0
  %441 = vmatpush1.msra.mxu0 0.0
  %442 = vmatprep.subr.mxu0 0.0
  %443 = vmatpush1.msra.mxu0 0.0
  %444 = vmatprep.subr.mxu0 0.0
  %445 = vmatpush1.msra.mxu0 0.0
  %446 = vmatprep.subr.mxu0 0.0
  %447 = vmatpush1.msra.mxu0 0.0
  %448 = vmatprep.subr.mxu0 0.0
  %449 = vmatpush1.msra.mxu0 0.0
  %450 = vmatprep.subr.mxu0 0.0
  %451 = vmatpush1.msra.mxu0 0.0
  %452 = vmatprep.subr.mxu0 0.0
  %453 = vmatpush1.msra.mxu0 0.0
  %454 = vmatprep.subr.mxu0 0.0
  %455 = vmatpush1.msra.mxu0 0.0
  %456 = vmatprep.subr.mxu0 0.0
  %457 = vmatpush1.msra.mxu0 0.0
  %458 = vmatprep.subr.mxu0 0.0
  %459 = vmatpush1.msra.mxu0 0.0
  %460 = vmatprep.subr.mxu0 0.0
  %461 = vmatpush1.msra.mxu0 0.0
  %462 = vmatprep.subr.mxu0 0.0
  %463 = vmatpush1.msra.mxu0 0.0
  %464 = vmatprep.mubr.f32.mxu0 0.0
  %465 = vmatmul.mubr.f32.gmra.mrb[0].mxu0 %v378
  %v466 = vpop.f32.mrb[0].mxu0
  %v467 = vadd.f32 %v399, %v466
  %v468 = vpop.f32.mrb[0].mxu0
  %469 = vdwg.mxu0
  %v470 = vmax.f32 %v467, 0.0
  %v471 = vadd.f32 %v470, %v286
  %v472 = vld [vmem:[%s3] sm:$0xff]
  %v473 = vld [vmem:[%s3 + $0x8] sm:$0xff]
  %v474 = vld [vmem:[%s3 + $0x10] sm:$0xff]
  %v475 = vld [vmem:[%s3 + $0x18] sm:$0xff]
  %v476 = vld [vmem:[%s3 + $0x20] sm:$0xff]
  %v477 = vld [vmem:[%s3 + $0x28] sm:$0xff]
  %v478 = vld [vmem:[%s3 + $0x30] sm:$0xff]
  %v479 = vld [vmem:[%s3 + $0x38] sm:$0xff]
  %v480 = vld [vmem:[%s3 + $0x40] sm:$0xff]
  %v481 = vld [vmem:[%s3 + $0x48] sm:$0xff]
  %v482 = vld [vmem:[%s3 + $0x50] sm:$0xff]
  %v483 = vld [vmem:[%s3 + $0x58] sm:$0xff]
  %v484 = vld [vmem:[%s3 + $0x60] sm:$0xff]
  %v485 = vld [vmem:[%s3 + $0x68] sm:$0xff]
  %v486 = vld [vmem:[%s3 + $0x70] sm:$0xff]
  %v487 = vld [vmem:[%s3 + $0x78] sm:$0xff]
  %v488 = vlaneseq
  %v489 = vshrl.u32 %v488, 7
  %v490 = vsub.s32 5, %v489
  %v491 = vrot.slane %v21, %v490
  %492 = vmatprep.subr.mxu0 0.0
  %493 = vmatpush1.msra.mxu0 %v472
  %494 = vmatprep.subr.mxu0 0.0
  %495 = vmatpush1.msra.mxu0 %v473
  %496 = vmatprep.subr.mxu0 0.0
  %497 = vmatpush1.msra.mxu0 %v474
  %498 = vmatprep.subr.mxu0 0.0
  %499 = vmatpush1.msra.mxu0 %v475
  %500 = vmatprep.subr.mxu0 0.0
  %501 = vmatpush1.msra.mxu0 %v476
  %502 = vmatprep.subr.mxu0 0.0
  %503 = vmatpush1.msra.mxu0 %v477
  %504 = vmatprep.subr.mxu0 0.0
  %505 = vmatpush1.msra.mxu0 %v478
  %506 = vmatprep.subr.mxu0 0.0
  %507 = vmatpush1.msra.mxu0 %v479
  %508 = vmatprep.subr.mxu0 0.0
  %509 = vmatpush1.msra.mxu0 %v480
  %510 = vmatprep.subr.mxu0 0.0
  %511 = vmatpush1.msra.mxu0 %v481
  %512 = vmatprep.subr.mxu0 0.0
  %513 = vmatpush1.msra.mxu0 %v482
  %514 = vmatprep.subr.mxu0 0.0
  %515 = vmatpush1.msra.mxu0 %v483
  %516 = vmatprep.subr.mxu0 0.0
  %517 = vmatpush1.msra.mxu0 %v484
  %518 = vmatprep.subr.mxu0 0.0
  %519 = vmatpush1.msra.mxu0 %v485
  %520 = vmatprep.subr.mxu0 0.0
  %521 = vmatpush1.msra.mxu0 %v486
  %522 = vmatprep.subr.mxu0 0.0
  %523 = vmatpush1.msra.mxu0 %v487
  %524 = vmatprep.subr.mxu0 0.0
  %525 = vmatpush1.msra.mxu0 0.0
  %526 = vmatprep.subr.mxu0 0.0
  %527 = vmatpush1.msra.mxu0 0.0
  %528 = vmatprep.subr.mxu0 0.0
  %529 = vmatpush1.msra.mxu0 0.0
  %530 = vmatprep.subr.mxu0 0.0
  %531 = vmatpush1.msra.mxu0 0.0
  %532 = vmatprep.subr.mxu0 0.0
  %533 = vmatpush1.msra.mxu0 0.0
  %534 = vmatprep.subr.mxu0 0.0
  %535 = vmatpush1.msra.mxu0 0.0
  %536 = vmatprep.subr.mxu0 0.0
  %537 = vmatpush1.msra.mxu0 0.0
  %538 = vmatprep.subr.mxu0 0.0
  %539 = vmatpush1.msra.mxu0 0.0
  %540 = vmatprep.subr.mxu0 0.0
  %541 = vmatpush1.msra.mxu0 0.0
  %542 = vmatprep.subr.mxu0 0.0
  %543 = vmatpush1.msra.mxu0 0.0
  %544 = vmatprep.subr.mxu0 0.0
  %545 = vmatpush1.msra.mxu0 0.0
  %546 = vmatprep.subr.mxu0 0.0
  %547 = vmatpush1.msra.mxu0 0.0
  %548 = vmatprep.subr.mxu0 0.0
  %549 = vmatpush1.msra.mxu0 0.0
  %550 = vmatprep.subr.mxu0 0.0
  %551 = vmatpush1.msra.mxu0 0.0
  %552 = vmatprep.subr.mxu0 0.0
  %553 = vmatpush1.msra.mxu0 0.0
  %554 = vmatprep.subr.mxu0 0.0
  %555 = vmatpush1.msra.mxu0 0.0
  %556 = vmatprep.mubr.f32.mxu0 0.0
  %557 = vmatmul.mubr.f32.gmra.mrb[0].mxu0 %v471
  %v558 = vpop.f32.mrb[0].mxu0
  %v559 = vadd.f32 %v491, %v558
  %v560 = vpop.f32.mrb[0].mxu0
  %561 = vdwg.mxu0
  %562 = vst [vmem:[%s5] sm:$0xff] %v559
  // Predicated region
  $region22: #{dqn_forward.1} parent=0 // pred_check
    _
  $region23: #{dqn_forward.1} parent=0 // pred_check_branch
    %564 = sbr.rel (0) target = $region25
  $region24: #{dqn_forward.1} parent=0 // pred_region
    _
  $region25: #{dqn_forward.1} parent=0 // pred_fallthru
    _
  // Predicated region
  $region26: #{dqn_forward.1} parent=0 // pred_check
    _
  $region27: #{dqn_forward.1} parent=0 // pred_check_branch
    %566 = sbr.rel (0) target = $region29
  $region28: #{dqn_forward.1} parent=0 // pred_region
    _
  $region29: #{dqn_forward.1} parent=0 // pred_fallthru
    _

</llo_original>
